<compile_context>
chip_gen: v6e
topology: v6e:2x2x1
jax: 0.10.0
libtpu: 0.0.40
codegen_flags: <defaults>
</compile_context>

<pallas_src>
import numpy as np
import jax
import jax.numpy as jnp
from jax.experimental import pallas as pl
from jax.experimental.pallas import tpu as pltpu

PER_ROW = 16          # density matrices per row: 16 * 4 f32 = 64 in, 16 * 8 = 128 out
IN_LANES = 4 * PER_ROW    # 64
OUT_LANES = 8 * PER_ROW   # 128
TB_ROWS_MAX = 8192        # up to 4 MiB output blocks per grid step


def _channel_kernel(xr_ref, xi_ref, mr_ref, mi_ref, o_ref):
    # xr/xi: (tb, 64) f32, mr/mi: (64, 128) f32 (resident, constant index_map)
    o_ref[...] = (
        jnp.dot(xr_ref[...], mr_ref[...],
                preferred_element_type=jnp.float32,
                precision=jax.lax.Precision.HIGHEST)
        + jnp.dot(xi_ref[...], mi_ref[...],
                  preferred_element_type=jnp.float32,
                  precision=jax.lax.Precision.HIGHEST))


def make_kraus(p_z=0.0, p_r0=0.0, p_r1=0.0):
    """Deterministic parameter init, identical to the PyTorch __init__."""
    K = np.zeros((2, 2, 6), dtype=np.complex64)
    K[:, :, 0] = np.sqrt(1 - p_z - p_r0 - p_r1) * np.array([[1, 0], [0, 1]])
    K[:, :, 1] = np.sqrt(p_z) * np.array([[1, 0], [0, -1]])
    K[:, :, 2] = np.sqrt(p_r0) * np.array([[1, 0], [0, 0]])
    K[:, :, 3] = np.sqrt(p_r0) * np.array([[0, 1], [0, 0]])
    K[:, :, 4] = np.sqrt(p_r1) * np.array([[0, 0], [1, 0]])
    K[:, :, 5] = np.sqrt(p_r1) * np.array([[0, 0], [0, 1]])
    return K


def _build_superops(K):
    """Host-side (runs once per channel): fold the Kraus set into two real
    block-diagonal matrices Mr (64,128), Mi (64,128) acting on split-plane
    row vectors:  out(…,128) = Xr @ Mr + Xi @ Mi, per-matrix output blocks
    laid out as [re0..re3 | im0..im3]."""
    K = np.asarray(K, dtype=np.complex64)
    M = np.einsum('imk,jnk->ijmn', K, np.conj(K)).reshape(4, 4)
    MT = M.T                                   # row-vector form: out = rho_vec @ M^T
    A = np.real(MT).astype(np.float32)         # (4, 4)
    Bm = np.imag(MT).astype(np.float32)        # (4, 4)
    top = np.concatenate([A, Bm], axis=1)      # xr contribution: [A | B]   (4, 8)
    bot = np.concatenate([-Bm, A], axis=1)     # xi contribution: [-B | A]  (4, 8)
    eye = np.eye(PER_ROW, dtype=np.float32)
    Mr = jnp.asarray(np.kron(eye, top))        # (64, 128)
    Mi = jnp.asarray(np.kron(eye, bot))        # (64, 128)
    return Mr, Mi


def _apply_channel(rho, Mr, Mi):
    """rho: complex64, shape (b, 2, 2) or (b, c, 2, 2)."""
    orig_shape = rho.shape
    rho = rho.astype(jnp.complex64)

    rho_vec = rho.reshape(-1, 4)               # (B, 4) complex
    B = rho_vec.shape[0]
    rows = -(-B // PER_ROW)                    # ceil(B / 16)
    pad = rows * PER_ROW - B                   # < 16 matrices of padding only

    # Split-plane f32 inputs; real/imag/pad/reshape fuse into one XLA pass.
    # TODO(synk): with CompilerParams(allow_input_fusion=...) even this pass
    # could fuse into the pallas_call input fetch; kept explicit for safety.
    xr = jnp.real(rho_vec).astype(jnp.float32)
    xi = jnp.imag(rho_vec).astype(jnp.float32)
    if pad:
        xr = jnp.pad(xr, ((0, pad), (0, 0)))
        xi = jnp.pad(xi, ((0, pad), (0, 0)))
    xr = xr.reshape(rows, IN_LANES)
    xi = xi.reshape(rows, IN_LANES)

    # Tile: as large as possible, but at least 2 grid steps when there is more
    # than one sublane row of work (engages both v7x TensorCores).
    half = -(-rows // 2)
    tb = min(TB_ROWS_MAX, max(8, ((half + 7) // 8) * 8))
    grid = (pl.cdiv(rows, tb),)                # ragged last block clipped by Pallas

    vec_spec = pl.BlockSpec((tb, IN_LANES), lambda i: (i, 0))
    out_spec = pl.BlockSpec((tb, OUT_LANES), lambda i: (i, 0))
    mat_spec = pl.BlockSpec((IN_LANES, OUT_LANES), lambda i: (0, 0))  # resident

    out = pl.pallas_call(
        _channel_kernel,
        out_shape=jax.ShapeDtypeStruct((rows, OUT_LANES), jnp.float32),
        grid_spec=pltpu.PrefetchScalarGridSpec(
            num_scalar_prefetch=0,
            grid=grid,
            in_specs=[vec_spec, vec_spec, mat_spec, mat_spec],
            out_specs=out_spec,
        ),
        compiler_params=pltpu.CompilerParams(
            dimension_semantics=("parallel",),
            vmem_limit_bytes=32 * 1024 * 1024),
    )(xr, xi, Mr, Mi)

    # Contiguous-slice postprocessing (no strided de-interleave).
    # TODO(synk): for circuits of stacked channels, keep activations in this
    # packed f32 layout between calls and only convert at the boundary.
    out2 = out.reshape(rows * PER_ROW, 8)[:B]              # (B, 8)
    out_c = jax.lax.complex(out2[:, :4], out2[:, 4:])      # (B, 4) complex64
    return out_c.reshape(orig_shape)


class ThermalRelaxationChannel:
    """JAX/Pallas equivalent of the PyTorch module; superop built once."""

    def __init__(self, p_z=0.0, p_r0=0.0, p_r1=0.0):
        self.p_z, self.p_r0, self.p_r1 = p_z, p_r0, p_r1
        self.K = make_kraus(p_z, p_r0, p_r1)          # numpy complex64 (2,2,6)
        self.Mr, self.Mi = _build_superops(self.K)    # jnp f32 constants

    def __call__(self, rho):
        return _apply_channel(rho, self.Mr, self.Mi)


def thermal_relaxation_forward(rho, K):
    """Functional form matching NoiseChannel.forward(rho, K)."""
    Mr, Mi = _build_superops(K)
    return _apply_channel(rho, Mr, Mi)


if __name__ == "__main__":
    # Deterministic "module parameters"
    channel = ThermalRelaxationChannel(p_z=0.1, p_r0=0.05, p_r1=0.02)
    K_np = channel.K

    key = jax.random.PRNGKey(0)
    k1, k2, k3, k4 = jax.random.split(key, 4)

    # Test 1: small (b, c, 2, 2) batch (single grid step).
    b, c = 2, 4
    rho = (jax.random.normal(k1, (b, c, 2, 2), dtype=jnp.float32)
           + 1j * jax.random.normal(k2, (b, c, 2, 2), dtype=jnp.float32)
           ).astype(jnp.complex64)
    out = jax.block_until_ready(channel(rho))
    ref = np.einsum('imk,bcmn,jnk->bcij', K_np, np.asarray(rho), np.conj(K_np))
    assert out.shape == ref.shape and out.dtype == jnp.complex64
    np.testing.assert_allclose(np.asarray(out), ref, rtol=1e-5, atol=1e-5)

    # Test 2: (B, 2, 2) path, large enough to exercise a multi-step grid with
    # a ragged (clipped) last block: B=300 -> rows=19, tb=16, grid=(2,).
    B2 = 300
    rho3 = (jax.random.normal(k3, (B2, 2, 2), dtype=jnp.float32)
            + 1j * jax.random.normal(k4, (B2, 2, 2), dtype=jnp.float32)
            ).astype(jnp.complex64)
    out3 = jax.block_until_ready(thermal_relaxation_forward(rho3, K_np))
    ref3 = np.einsum('imk,bmn,jnk->bij', K_np, np.asarray(rho3), np.conj(K_np))
    np.testing.assert_allclose(np.asarray(out3), ref3, rtol=1e-5, atol=1e-5)

    print("KERNEL_OK")
</pallas_src>

<mosaic_0001>
module attributes {stable_mosaic.version = 11 : i64} {
  func.func @_channel_kernel(%arg0: i32, %arg1: memref<8x64xf32, #tpu.memory_space<vmem>>, %arg2: memref<8x64xf32, #tpu.memory_space<vmem>>, %arg3: memref<64x128xf32, #tpu.memory_space<vmem>>, %arg4: memref<64x128xf32, #tpu.memory_space<vmem>>, %arg5: memref<8x128xf32, #tpu.memory_space<vmem>>) attributes {dimension_semantics = [#tpu.dimension_semantics<parallel>], iteration_bounds = array<i64: 1>, scalar_prefetch = 0 : i64, scratch_operands = 0 : i64, tpu.core_type = #tpu.core_type<tc>, window_params = [{transform_indices = @transform_0, window_bounds = array<i64: 8, 64>}, {transform_indices = @transform_1, window_bounds = array<i64: 8, 64>}, {pipeline_mode = #tpu.pipeline_mode<synchronous>, transform_indices = @transform_2, window_bounds = array<i64: 64, 128>}, {pipeline_mode = #tpu.pipeline_mode<synchronous>, transform_indices = @transform_3, window_bounds = array<i64: 64, 128>}, {transform_indices = @transform_4, window_bounds = array<i64: 8, 128>}]} {
    %c0 = arith.constant 0 : index
    %c0_0 = arith.constant 0 : index
    %0 = vector.load %arg1[%c0, %c0_0] : memref<8x64xf32, #tpu.memory_space<vmem>>, vector<8x64xf32>
    %c0_1 = arith.constant 0 : index
    %c0_2 = arith.constant 0 : index
    %1 = vector.load %arg3[%c0_1, %c0_2] : memref<64x128xf32, #tpu.memory_space<vmem>>, vector<64x128xf32>
    %cst = arith.constant dense<0.000000e+00> : vector<8x128xf32>
    %2 = tpu.matmul %0, %1, %cst {dimension_numbers = #tpu.dot_dimension_numbers<[1], [0], [0], [1], [0, 0, 1, 1], [], []>, precision = #tpu.contract_precision<fp32>} : vector<8x64xf32>, vector<64x128xf32>, vector<8x128xf32> -> vector<8x128xf32>
    %c0_3 = arith.constant 0 : index
    %c0_4 = arith.constant 0 : index
    %3 = vector.load %arg2[%c0_3, %c0_4] : memref<8x64xf32, #tpu.memory_space<vmem>>, vector<8x64xf32>
    %c0_5 = arith.constant 0 : index
    %c0_6 = arith.constant 0 : index
    %4 = vector.load %arg4[%c0_5, %c0_6] : memref<64x128xf32, #tpu.memory_space<vmem>>, vector<64x128xf32>
    %cst_7 = arith.constant dense<0.000000e+00> : vector<8x128xf32>
    %5 = tpu.matmul %3, %4, %cst_7 {dimension_numbers = #tpu.dot_dimension_numbers<[1], [0], [0], [1], [0, 0, 1, 1], [], []>, precision = #tpu.contract_precision<fp32>} : vector<8x64xf32>, vector<64x128xf32>, vector<8x128xf32> -> vector<8x128xf32>
    %6 = arith.addf %2, %5 : vector<8x128xf32>
    %c0_8 = arith.constant 0 : index
    %c0_9 = arith.constant 0 : index
    %7 = vector.load %arg5[%c0_8, %c0_9] : memref<8x128xf32, #tpu.memory_space<vmem>>, vector<8x128xf32>
    tpu.vector_store %arg5[%c0_8, %c0_9], %6 {strides = array<i32>} : memref<8x128xf32, #tpu.memory_space<vmem>>, vector<8x128xf32>,
    return
  }
  func.func @transform_0(%arg0: i32) -> (i32, i32) {
    %c0_i32 = arith.constant 0 : i32
    %c0_i32_0 = arith.constant 0 : i32
    return %arg0, %c0_i32 : i32, i32
  }
  func.func @transform_1(%arg0: i32) -> (i32, i32) {
    %c0_i32 = arith.constant 0 : i32
    %c0_i32_0 = arith.constant 0 : i32
    return %arg0, %c0_i32 : i32, i32
  }
  func.func @transform_2(%arg0: i32) -> (i32, i32) {
    %c0_i32 = arith.constant 0 : i32
    %c0_i32_0 = arith.constant 0 : i32
    %c0_i32_1 = arith.constant 0 : i32
    return %c0_i32, %c0_i32_0 : i32, i32
  }
  func.func @transform_3(%arg0: i32) -> (i32, i32) {
    %c0_i32 = arith.constant 0 : i32
    %c0_i32_0 = arith.constant 0 : i32
    %c0_i32_1 = arith.constant 0 : i32
    return %c0_i32, %c0_i32_0 : i32, i32
  }
  func.func @transform_4(%arg0: i32) -> (i32, i32) {
    %c0_i32 = arith.constant 0 : i32
    %c0_i32_0 = arith.constant 0 : i32
    return %arg0, %c0_i32 : i32, i32
  }
}

</mosaic_0001>

<llo_original>
// kernel: tpu_custom_call.1
$region0: #{tpu_custom_call.1}
  #allocation0 [shape = 'u32[]', space=smem, size = 0x4, offset = 0x4, fixed_abs, tag = 'smem constant byte address 0x4 - core index']
  #allocation1 [shape = 'u32[144,128]{1,0:T(1,128)}', space=vmem, size = 0x12000, scoped, tag = 'internal scratch']
  %s0 = inlined_call_operand.hbm [shape: f32[1,64], index: 0, kind: input, shape index: {}]
  %s1 = inlined_call_operand.vmem [shape: f32[1,64], index: 1, kind: input, shape index: {}]
  %s2 = inlined_call_operand.hbm [shape: f32[64,128], index: 2, kind: input, shape index: {}]
  %s3 = inlined_call_operand.hbm [shape: f32[64,128], index: 3, kind: input, shape index: {}]
  %s4 = inlined_call_operand.hbm [shape: f32[1,128], index: 4, kind: output, shape index: {}]
  %s5 = sld [smem:[#allocation0]]
  $region38: #{tpu_custom_call.1} parent=0
    _
  %s7 = ssub.s32 1, %s5
  %s8 = scalar_select 0, %s7, %s5
  $region1: #{tpu_custom_call.1} parent=0
    #allocation2 [shape = 'u8[4096]{0}', space=vmem, size = 0x1000, scoped, tag = 'input window, operand 0, single buffered']
    #allocation3 [shape = 's32[1]{0}', space=sflag, size = 0x4, scoped, tag = 'scoped memory for tpu_custom_call.1']
    #allocation4 [shape = 's32[1]{0}', space=sflag, size = 0x4, scoped, tag = 'scoped memory for tpu_custom_call.1']
    #allocation5 [shape = 'u8[32768]{0}', space=vmem, size = 0x8000, scoped, tag = 'input window, operand 2, single buffered']
    #allocation6 [shape = 's32[1]{0}', space=sflag, size = 0x4, scoped, tag = 'scoped memory for tpu_custom_call.1']
    #allocation7 [shape = 'u8[32768]{0}', space=vmem, size = 0x8000, scoped, tag = 'input window, operand 3, single buffered']
    #allocation8 [shape = 'u8[4096]{0}', space=vmem, size = 0x1000, scoped, tag = 'output window, operand 0, single buffered']
    %9 = vsyncpa [#allocation3], 0
    %10 = vsyncpa [#allocation6], 0
    %11 = vsyncpa [#allocation4], 0
    // Predicated region
    $region2: #{tpu_custom_call.1} parent=1 // pred_check
      _
    $region3: #{tpu_custom_call.1} parent=1 // pred_check_branch
      %13 = sbr.rel (0) target = $region5
    $region4: #{tpu_custom_call.1} parent=1 // pred_region
      %s15 = ssub.s32 128, 16
      %16 = vsyncadd [#allocation3], %s15
      %s17 = sshll.u32 [#allocation2], 4
      %s18 = int_to_ptr.vmem [resolvable:$true] %s17
      %23 = dma.hbm_to_vmem [thread:$0]  %s0, 16, %s18, [#allocation3], 16, 16, 1
    $region5: #{tpu_custom_call.1} parent=1 // pred_fallthru
      _
    // Predicated region
    $region6: #{tpu_custom_call.1} parent=1 // pred_check
      _
    $region7: #{tpu_custom_call.1} parent=1 // pred_check_branch
      %25 = sbr.rel (0) target = $region9
    $region8: #{tpu_custom_call.1} parent=1 // pred_region
      _
    $region9: #{tpu_custom_call.1} parent=1 // pred_fallthru
      _
    // Predicated region
    $region10: #{tpu_custom_call.1} parent=1 // pred_check
      _
    $region11: #{tpu_custom_call.1} parent=1 // pred_check_branch
      %27 = sbr.rel (0) target = $region13
    $region12: #{tpu_custom_call.1} parent=1 // pred_region
      %s29 = ssub.s32 1024, 1024
      %30 = vsyncadd [#allocation6], %s29
      %s31 = sshll.u32 [#allocation5], 4
      %s32 = int_to_ptr.vmem [resolvable:$true] %s31
      %37 = dma.hbm_to_vmem [thread:$0]  %s2, 1024, %s32, [#allocation6], 128, 128, 8
    $region13: #{tpu_custom_call.1} parent=1 // pred_fallthru
      _
    // Predicated region
    $region14: #{tpu_custom_call.1} parent=1 // pred_check
      _
    $region15: #{tpu_custom_call.1} parent=1 // pred_check_branch
      %39 = sbr.rel (0) target = $region17
    $region16: #{tpu_custom_call.1} parent=1 // pred_region
      %s41 = ssub.s32 1024, 1024
      %42 = vsyncadd [#allocation6], %s41
      %s43 = sshll.u32 [#allocation7], 4
      %s44 = int_to_ptr.vmem [resolvable:$true] %s43
      %49 = dma.hbm_to_vmem [thread:$0]  %s3, 1024, %s44, [#allocation6], 128, 128, 8
    $region17: #{tpu_custom_call.1} parent=1 // pred_fallthru
      _
    // Predicated region
    $region18: #{tpu_custom_call.1} parent=1 // pred_check
      _
    $region19: #{tpu_custom_call.1} parent=1 // pred_check_branch
      %51 = sbr.rel (0) target = $region21
    $region20: #{tpu_custom_call.1} parent=1 // pred_region
      %52 = dma.done [#allocation3], 128
    $region21: #{tpu_custom_call.1} parent=1 // pred_fallthru
      _
    // Predicated region
    $region22: #{tpu_custom_call.1} parent=1 // pred_check
      _
    $region23: #{tpu_custom_call.1} parent=1 // pred_check_branch
      %54 = sbr.rel (0) target = $region25
    $region24: #{tpu_custom_call.1} parent=1 // pred_region
      %55 = dma.done [#allocation6], 1024
    $region25: #{tpu_custom_call.1} parent=1 // pred_fallthru
      _
    // Predicated region
    $region26: #{tpu_custom_call.1} parent=1 // pred_check
      _
    $region27: #{tpu_custom_call.1} parent=1 // pred_check_branch
      %57 = sbr.rel (0) target = $region29
    $region28: #{tpu_custom_call.1} parent=1 // pred_region
      %58 = dma.done [#allocation6], 1024
    $region29: #{tpu_custom_call.1} parent=1 // pred_fallthru
      _
    %v59 = vld [vmem:[#allocation2] sm:$0xff]
    %v60 = vld [vmem:[#allocation5] sm:$0xff]
    %v61 = vld [vmem:[#allocation5 + $0x8] sm:$0xff]
    %v62 = vld [vmem:[#allocation5 + $0x10] sm:$0xff]
    %v63 = vld [vmem:[#allocation5 + $0x18] sm:$0xff]
    %v64 = vld [vmem:[#allocation5 + $0x20] sm:$0xff]
    %v65 = vld [vmem:[#allocation5 + $0x28] sm:$0xff]
    %v66 = vld [vmem:[#allocation5 + $0x30] sm:$0xff]
    %v67 = vld [vmem:[#allocation5 + $0x38] sm:$0xff]
    %v68 = vld [vmem:[%s1] sm:$0xff]
    %v69 = vld [vmem:[#allocation7] sm:$0xff]
    %v70 = vld [vmem:[#allocation7 + $0x8] sm:$0xff]
    %v71 = vld [vmem:[#allocation7 + $0x10] sm:$0xff]
    %v72 = vld [vmem:[#allocation7 + $0x18] sm:$0xff]
    %v73 = vld [vmem:[#allocation7 + $0x20] sm:$0xff]
    %v74 = vld [vmem:[#allocation7 + $0x28] sm:$0xff]
    %v75 = vld [vmem:[#allocation7 + $0x30] sm:$0xff]
    %v76 = vld [vmem:[#allocation7 + $0x38] sm:$0xff]
    %vm77 = vcmask 523264
    %v79 = vsel %vm77, %v68, 0
    %81 = vmatprep.subr.mxu0 0.0
    %82 = vmatpush1.msra.mxu0 0.0
    %83 = vmatprep.subr.mxu0 0.0
    %84 = vmatpush1.msra.mxu0 0.0
    %85 = vmatprep.subr.mxu0 0.0
    %86 = vmatpush1.msra.mxu0 0.0
    %87 = vmatprep.subr.mxu0 0.0
    %88 = vmatpush1.msra.mxu0 0.0
    %89 = vmatprep.subr.mxu0 0.0
    %90 = vmatpush1.msra.mxu0 0.0
    %91 = vmatprep.subr.mxu0 0.0
    %92 = vmatpush1.msra.mxu0 0.0
    %93 = vmatprep.subr.mxu0 0.0
    %94 = vmatpush1.msra.mxu0 0.0
    %95 = vmatprep.subr.mxu0 0.0
    %96 = vmatpush1.msra.mxu0 0.0
    %97 = vmatprep.subr.mxu0 0.0
    %v98 = vand.u32 %v76, 4294901760
    %99 = vmatpush1.msra.mxu0 %v98
    %100 = vmatprep.subr.mxu0 0.0
    %v101 = vand.u32 %v75, 4294901760
    %102 = vmatpush1.msra.mxu0 %v101
    %103 = vmatprep.subr.mxu0 0.0
    %v104 = vand.u32 %v74, 4294901760
    %105 = vmatpush1.msra.mxu0 %v104
    %106 = vmatprep.subr.mxu0 0.0
    %v107 = vand.u32 %v73, 4294901760
    %108 = vmatpush1.msra.mxu0 %v107
    %109 = vmatprep.subr.mxu0 0.0
    %v110 = vand.u32 %v72, 4294901760
    %111 = vmatpush1.msra.mxu0 %v110
    %112 = vmatprep.subr.mxu0 0.0
    %v113 = vand.u32 %v71, 4294901760
    %114 = vmatpush1.msra.mxu0 %v113
    %115 = vmatprep.subr.mxu0 0.0
    %v116 = vand.u32 %v70, 4294901760
    %117 = vmatpush1.msra.mxu0 %v116
    %118 = vmatprep.subr.mxu0 0.0
    %v119 = vand.u32 %v69, 4294901760
    %120 = vmatpush1.msra.mxu0 %v119
    %121 = vmatprep.subr.mxu0 0.0
    %122 = vmatpush2.msra.mxu0 0.0
    %123 = vmatprep.subr.mxu0 0.0
    %124 = vmatpush2.msra.mxu0 0.0
    %125 = vmatprep.subr.mxu0 0.0
    %126 = vmatpush2.msra.mxu0 0.0
    %127 = vmatprep.subr.mxu0 0.0
    %128 = vmatpush2.msra.mxu0 0.0
    %129 = vmatprep.subr.mxu0 0.0
    %130 = vmatpush2.msra.mxu0 0.0
    %131 = vmatprep.subr.mxu0 0.0
    %132 = vmatpush2.msra.mxu0 0.0
    %133 = vmatprep.subr.mxu0 0.0
    %134 = vmatpush2.msra.mxu0 0.0
    %135 = vmatprep.subr.mxu0 0.0
    %136 = vmatpush2.msra.mxu0 0.0
    %137 = vmatprep.subr.mxu0 0.0
    %138 = vmatpush2.msra.mxu0 0.0
    %139 = vmatprep.subr.mxu0 0.0
    %140 = vmatpush2.msra.mxu0 0.0
    %141 = vmatprep.subr.mxu0 0.0
    %142 = vmatpush2.msra.mxu0 0.0
    %143 = vmatprep.subr.mxu0 0.0
    %144 = vmatpush2.msra.mxu0 0.0
    %145 = vmatprep.subr.mxu0 0.0
    %146 = vmatpush2.msra.mxu0 0.0
    %147 = vmatprep.subr.mxu0 0.0
    %148 = vmatpush2.msra.mxu0 0.0
    %149 = vmatprep.subr.mxu0 0.0
    %150 = vmatpush2.msra.mxu0 0.0
    %151 = vmatprep.subr.mxu0 0.0
    %152 = vmatpush2.msra.mxu0 0.0
    %153 = vmatprep.mubr.f32.mxu0 0.0
    %v154 = vand.u32 %v79, 4294901760
    %v155 = vsub.f32 %v79, %v154
    %v156 = vand.u32 %v155, 4294901760
    %v157 = vsub.f32 %v155, %v156
    %v158 = vand.u32 %v157, 4294901760
    %159 = vmatmul.mubr.f32.gmra.mxu0 %v158
    %v160 = vpop.f32.mrf.mxu0
    %v161 = vadd.f32 0.0, %v160
    %v162 = vpop.f32.mrf.mxu0
    %163 = vdwg.mxu0
    %164 = vmatprep.subr.mxu0 0.0
    %165 = vmatpush1.msra.mxu0 0.0
    %166 = vmatprep.subr.mxu0 0.0
    %167 = vmatpush1.msra.mxu0 0.0
    %168 = vmatprep.subr.mxu0 0.0
    %169 = vmatpush1.msra.mxu0 0.0
    %170 = vmatprep.subr.mxu0 0.0
    %171 = vmatpush1.msra.mxu0 0.0
    %172 = vmatprep.subr.mxu0 0.0
    %173 = vmatpush1.msra.mxu0 0.0
    %174 = vmatprep.subr.mxu0 0.0
    %175 = vmatpush1.msra.mxu0 0.0
    %176 = vmatprep.subr.mxu0 0.0
    %177 = vmatpush1.msra.mxu0 0.0
    %178 = vmatprep.subr.mxu0 0.0
    %179 = vmatpush1.msra.mxu0 0.0
    %180 = vmatprep.subr.mxu0 0.0
    %v181 = vand.u32 %v76, 4294901760
    %v182 = vsub.f32 %v76, %v181
    %v183 = vand.u32 %v182, 4294901760
    %v184 = vsub.f32 %v182, %v183
    %v185 = vand.u32 %v184, 4294901760
    %186 = vmatpush1.msra.mxu0 %v185
    %187 = vmatprep.subr.mxu0 0.0
    %v188 = vand.u32 %v75, 4294901760
    %v189 = vsub.f32 %v75, %v188
    %v190 = vand.u32 %v189, 4294901760
    %v191 = vsub.f32 %v189, %v190
    %v192 = vand.u32 %v191, 4294901760
    %193 = vmatpush1.msra.mxu0 %v192
    %194 = vmatprep.subr.mxu0 0.0
    %v195 = vand.u32 %v74, 4294901760
    %v196 = vsub.f32 %v74, %v195
    %v197 = vand.u32 %v196, 4294901760
    %v198 = vsub.f32 %v196, %v197
    %v199 = vand.u32 %v198, 4294901760
    %200 = vmatpush1.msra.mxu0 %v199
    %201 = vmatprep.subr.mxu0 0.0
    %v202 = vand.u32 %v73, 4294901760
    %v203 = vsub.f32 %v73, %v202
    %v204 = vand.u32 %v203, 4294901760
    %v205 = vsub.f32 %v203, %v204
    %v206 = vand.u32 %v205, 4294901760
    %207 = vmatpush1.msra.mxu0 %v206
    %208 = vmatprep.subr.mxu0 0.0
    %v209 = vand.u32 %v72, 4294901760
    %v210 = vsub.f32 %v72, %v209
    %v211 = vand.u32 %v210, 4294901760
    %v212 = vsub.f32 %v210, %v211
    %v213 = vand.u32 %v212, 4294901760
    %214 = vmatpush1.msra.mxu0 %v213
    %215 = vmatprep.subr.mxu0 0.0
    %v216 = vand.u32 %v71, 4294901760
    %v217 = vsub.f32 %v71, %v216
    %v218 = vand.u32 %v217, 4294901760
    %v219 = vsub.f32 %v217, %v218
    %v220 = vand.u32 %v219, 4294901760
    %221 = vmatpush1.msra.mxu0 %v220
    %222 = vmatprep.subr.mxu0 0.0
    %v223 = vand.u32 %v70, 4294901760
    %v224 = vsub.f32 %v70, %v223
    %v225 = vand.u32 %v224, 4294901760
    %v226 = vsub.f32 %v224, %v225
    %v227 = vand.u32 %v226, 4294901760
    %228 = vmatpush1.msra.mxu0 %v227
    %229 = vmatprep.subr.mxu0 0.0
    %v230 = vand.u32 %v69, 4294901760
    %v231 = vsub.f32 %v69, %v230
    %v232 = vand.u32 %v231, 4294901760
    %v233 = vsub.f32 %v231, %v232
    %v234 = vand.u32 %v233, 4294901760
    %235 = vmatpush1.msra.mxu0 %v234
    %236 = vmatprep.subr.mxu0 0.0
    %237 = vmatpush2.msra.mxu0 0.0
    %238 = vmatprep.subr.mxu0 0.0
    %239 = vmatpush2.msra.mxu0 0.0
    %240 = vmatprep.subr.mxu0 0.0
    %241 = vmatpush2.msra.mxu0 0.0
    %242 = vmatprep.subr.mxu0 0.0
    %243 = vmatpush2.msra.mxu0 0.0
    %244 = vmatprep.subr.mxu0 0.0
    %245 = vmatpush2.msra.mxu0 0.0
    %246 = vmatprep.subr.mxu0 0.0
    %247 = vmatpush2.msra.mxu0 0.0
    %248 = vmatprep.subr.mxu0 0.0
    %249 = vmatpush2.msra.mxu0 0.0
    %250 = vmatprep.subr.mxu0 0.0
    %251 = vmatpush2.msra.mxu0 0.0
    %252 = vmatprep.subr.mxu0 0.0
    %253 = vmatpush2.msra.mxu0 0.0
    %254 = vmatprep.subr.mxu0 0.0
    %255 = vmatpush2.msra.mxu0 0.0
    %256 = vmatprep.subr.mxu0 0.0
    %257 = vmatpush2.msra.mxu0 0.0
    %258 = vmatprep.subr.mxu0 0.0
    %259 = vmatpush2.msra.mxu0 0.0
    %260 = vmatprep.subr.mxu0 0.0
    %261 = vmatpush2.msra.mxu0 0.0
    %262 = vmatprep.subr.mxu0 0.0
    %263 = vmatpush2.msra.mxu0 0.0
    %264 = vmatprep.subr.mxu0 0.0
    %265 = vmatpush2.msra.mxu0 0.0
    %266 = vmatprep.subr.mxu0 0.0
    %267 = vmatpush2.msra.mxu0 0.0
    %268 = vmatprep.mubr.f32.mxu0 0.0
    %v269 = vand.u32 %v79, 4294901760
    %270 = vmatmul.mubr.f32.gmra.mxu0 %v269
    %v271 = vpop.f32.mrf.mxu0
    %v272 = vadd.f32 %v161, %v271
    %v273 = vpop.f32.mrf.mxu0
    %274 = vdwg.mxu0
    %275 = vmatprep.subr.mxu0 0.0
    %276 = vmatpush1.msra.mxu0 0.0
    %277 = vmatprep.subr.mxu0 0.0
    %278 = vmatpush1.msra.mxu0 0.0
    %279 = vmatprep.subr.mxu0 0.0
    %280 = vmatpush1.msra.mxu0 0.0
    %281 = vmatprep.subr.mxu0 0.0
    %282 = vmatpush1.msra.mxu0 0.0
    %283 = vmatprep.subr.mxu0 0.0
    %284 = vmatpush1.msra.mxu0 0.0
    %285 = vmatprep.subr.mxu0 0.0
    %286 = vmatpush1.msra.mxu0 0.0
    %287 = vmatprep.subr.mxu0 0.0
    %288 = vmatpush1.msra.mxu0 0.0
    %289 = vmatprep.subr.mxu0 0.0
    %290 = vmatpush1.msra.mxu0 0.0
    %291 = vmatprep.subr.mxu0 0.0
    %v292 = vand.u32 %v76, 4294901760
    %v293 = vsub.f32 %v76, %v292
    %294 = vmatpush1.msra.mxu0 %v293
    %295 = vmatprep.subr.mxu0 0.0
    %v296 = vand.u32 %v75, 4294901760
    %v297 = vsub.f32 %v75, %v296
    %298 = vmatpush1.msra.mxu0 %v297
    %299 = vmatprep.subr.mxu0 0.0
    %v300 = vand.u32 %v74, 4294901760
    %v301 = vsub.f32 %v74, %v300
    %302 = vmatpush1.msra.mxu0 %v301
    %303 = vmatprep.subr.mxu0 0.0
    %v304 = vand.u32 %v73, 4294901760
    %v305 = vsub.f32 %v73, %v304
    %306 = vmatpush1.msra.mxu0 %v305
    %307 = vmatprep.subr.mxu0 0.0
    %v308 = vand.u32 %v72, 4294901760
    %v309 = vsub.f32 %v72, %v308
    %310 = vmatpush1.msra.mxu0 %v309
    %311 = vmatprep.subr.mxu0 0.0
    %v312 = vand.u32 %v71, 4294901760
    %v313 = vsub.f32 %v71, %v312
    %314 = vmatpush1.msra.mxu0 %v313
    %315 = vmatprep.subr.mxu0 0.0
    %v316 = vand.u32 %v70, 4294901760
    %v317 = vsub.f32 %v70, %v316
    %318 = vmatpush1.msra.mxu0 %v317
    %319 = vmatprep.subr.mxu0 0.0
    %v320 = vand.u32 %v69, 4294901760
    %v321 = vsub.f32 %v69, %v320
    %322 = vmatpush1.msra.mxu0 %v321
    %323 = vmatprep.subr.mxu0 0.0
    %324 = vmatpush2.msra.mxu0 0.0
    %325 = vmatprep.subr.mxu0 0.0
    %326 = vmatpush2.msra.mxu0 0.0
    %327 = vmatprep.subr.mxu0 0.0
    %328 = vmatpush2.msra.mxu0 0.0
    %329 = vmatprep.subr.mxu0 0.0
    %330 = vmatpush2.msra.mxu0 0.0
    %331 = vmatprep.subr.mxu0 0.0
    %332 = vmatpush2.msra.mxu0 0.0
    %333 = vmatprep.subr.mxu0 0.0
    %334 = vmatpush2.msra.mxu0 0.0
    %335 = vmatprep.subr.mxu0 0.0
    %336 = vmatpush2.msra.mxu0 0.0
    %337 = vmatprep.subr.mxu0 0.0
    %338 = vmatpush2.msra.mxu0 0.0
    %339 = vmatprep.subr.mxu0 0.0
    %340 = vmatpush2.msra.mxu0 0.0
    %341 = vmatprep.subr.mxu0 0.0
    %342 = vmatpush2.msra.mxu0 0.0
    %343 = vmatprep.subr.mxu0 0.0
    %344 = vmatpush2.msra.mxu0 0.0
    %345 = vmatprep.subr.mxu0 0.0
    %346 = vmatpush2.msra.mxu0 0.0
    %347 = vmatprep.subr.mxu0 0.0
    %348 = vmatpush2.msra.mxu0 0.0
    %349 = vmatprep.subr.mxu0 0.0
    %350 = vmatpush2.msra.mxu0 0.0
    %351 = vmatprep.subr.mxu0 0.0
    %352 = vmatpush2.msra.mxu0 0.0
    %353 = vmatprep.subr.mxu0 0.0
    %354 = vmatpush2.msra.mxu0 0.0
    %355 = vmatprep.mubr.f32.mxu0 0.0
    %v356 = vand.u32 %v79, 4294901760
    %v357 = vsub.f32 %v79, %v356
    %358 = vmatmul.mubr.f32.gmra.mxu0 %v357
    %v359 = vpop.f32.mrf.mxu0
    %v360 = vadd.f32 %v272, %v359
    %v361 = vpop.f32.mrf.mxu0
    %362 = vdwg.mxu0
    %363 = vmatprep.subr.mxu0 0.0
    %364 = vmatpush1.msra.mxu0 0.0
    %365 = vmatprep.subr.mxu0 0.0
    %366 = vmatpush1.msra.mxu0 0.0
    %367 = vmatprep.subr.mxu0 0.0
    %368 = vmatpush1.msra.mxu0 0.0
    %369 = vmatprep.subr.mxu0 0.0
    %370 = vmatpush1.msra.mxu0 0.0
    %371 = vmatprep.subr.mxu0 0.0
    %372 = vmatpush1.msra.mxu0 0.0
    %373 = vmatprep.subr.mxu0 0.0
    %374 = vmatpush1.msra.mxu0 0.0
    %375 = vmatprep.subr.mxu0 0.0
    %376 = vmatpush1.msra.mxu0 0.0
    %377 = vmatprep.subr.mxu0 0.0
    %378 = vmatpush1.msra.mxu0 0.0
    %379 = vmatprep.subr.mxu0 0.0
    %v380 = vand.u32 %v76, 4294901760
    %381 = vmatpush1.msra.mxu0 %v380
    %382 = vmatprep.subr.mxu0 0.0
    %v383 = vand.u32 %v75, 4294901760
    %384 = vmatpush1.msra.mxu0 %v383
    %385 = vmatprep.subr.mxu0 0.0
    %v386 = vand.u32 %v74, 4294901760
    %387 = vmatpush1.msra.mxu0 %v386
    %388 = vmatprep.subr.mxu0 0.0
    %v389 = vand.u32 %v73, 4294901760
    %390 = vmatpush1.msra.mxu0 %v389
    %391 = vmatprep.subr.mxu0 0.0
    %v392 = vand.u32 %v72, 4294901760
    %393 = vmatpush1.msra.mxu0 %v392
    %394 = vmatprep.subr.mxu0 0.0
    %v395 = vand.u32 %v71, 4294901760
    %396 = vmatpush1.msra.mxu0 %v395
    %397 = vmatprep.subr.mxu0 0.0
    %v398 = vand.u32 %v70, 4294901760
    %399 = vmatpush1.msra.mxu0 %v398
    %400 = vmatprep.subr.mxu0 0.0
    %v401 = vand.u32 %v69, 4294901760
    %402 = vmatpush1.msra.mxu0 %v401
    %403 = vmatprep.subr.mxu0 0.0
    %404 = vmatpush2.msra.mxu0 0.0
    %405 = vmatprep.subr.mxu0 0.0
    %406 = vmatpush2.msra.mxu0 0.0
    %407 = vmatprep.subr.mxu0 0.0
    %408 = vmatpush2.msra.mxu0 0.0
    %409 = vmatprep.subr.mxu0 0.0
    %410 = vmatpush2.msra.mxu0 0.0
    %411 = vmatprep.subr.mxu0 0.0
    %412 = vmatpush2.msra.mxu0 0.0
    %413 = vmatprep.subr.mxu0 0.0
    %414 = vmatpush2.msra.mxu0 0.0
    %415 = vmatprep.subr.mxu0 0.0
    %416 = vmatpush2.msra.mxu0 0.0
    %417 = vmatprep.subr.mxu0 0.0
    %418 = vmatpush2.msra.mxu0 0.0
    %419 = vmatprep.subr.mxu0 0.0
    %420 = vmatpush2.msra.mxu0 0.0
    %421 = vmatprep.subr.mxu0 0.0
    %422 = vmatpush2.msra.mxu0 0.0
    %423 = vmatprep.subr.mxu0 0.0
    %424 = vmatpush2.msra.mxu0 0.0
    %425 = vmatprep.subr.mxu0 0.0
    %426 = vmatpush2.msra.mxu0 0.0
    %427 = vmatprep.subr.mxu0 0.0
    %428 = vmatpush2.msra.mxu0 0.0
    %429 = vmatprep.subr.mxu0 0.0
    %430 = vmatpush2.msra.mxu0 0.0
    %431 = vmatprep.subr.mxu0 0.0
    %432 = vmatpush2.msra.mxu0 0.0
    %433 = vmatprep.subr.mxu0 0.0
    %434 = vmatpush2.msra.mxu0 0.0
    %435 = vmatprep.mubr.f32.mxu0 0.0
    %v436 = vand.u32 %v79, 4294901760
    %v437 = vsub.f32 %v79, %v436
    %v438 = vand.u32 %v437, 4294901760
    %439 = vmatmul.mubr.f32.gmra.mxu0 %v438
    %v440 = vpop.f32.mrf.mxu0
    %v441 = vadd.f32 %v360, %v440
    %v442 = vpop.f32.mrf.mxu0
    %443 = vdwg.mxu0
    %444 = vmatprep.subr.mxu0 0.0
    %445 = vmatpush1.msra.mxu0 0.0
    %446 = vmatprep.subr.mxu0 0.0
    %447 = vmatpush1.msra.mxu0 0.0
    %448 = vmatprep.subr.mxu0 0.0
    %449 = vmatpush1.msra.mxu0 0.0
    %450 = vmatprep.subr.mxu0 0.0
    %451 = vmatpush1.msra.mxu0 0.0
    %452 = vmatprep.subr.mxu0 0.0
    %453 = vmatpush1.msra.mxu0 0.0
    %454 = vmatprep.subr.mxu0 0.0
    %455 = vmatpush1.msra.mxu0 0.0
    %456 = vmatprep.subr.mxu0 0.0
    %457 = vmatpush1.msra.mxu0 0.0
    %458 = vmatprep.subr.mxu0 0.0
    %459 = vmatpush1.msra.mxu0 0.0
    %460 = vmatprep.subr.mxu0 0.0
    %v461 = vand.u32 %v76, 4294901760
    %v462 = vsub.f32 %v76, %v461
    %v463 = vand.u32 %v462, 4294901760
    %464 = vmatpush1.msra.mxu0 %v463
    %465 = vmatprep.subr.mxu0 0.0
    %v466 = vand.u32 %v75, 4294901760
    %v467 = vsub.f32 %v75, %v466
    %v468 = vand.u32 %v467, 4294901760
    %469 = vmatpush1.msra.mxu0 %v468
    %470 = vmatprep.subr.mxu0 0.0
    %v471 = vand.u32 %v74, 4294901760
    %v472 = vsub.f32 %v74, %v471
    %v473 = vand.u32 %v472, 4294901760
    %474 = vmatpush1.msra.mxu0 %v473
    %475 = vmatprep.subr.mxu0 0.0
    %v476 = vand.u32 %v73, 4294901760
    %v477 = vsub.f32 %v73, %v476
    %v478 = vand.u32 %v477, 4294901760
    %479 = vmatpush1.msra.mxu0 %v478
    %480 = vmatprep.subr.mxu0 0.0
    %v481 = vand.u32 %v72, 4294901760
    %v482 = vsub.f32 %v72, %v481
    %v483 = vand.u32 %v482, 4294901760
    %484 = vmatpush1.msra.mxu0 %v483
    %485 = vmatprep.subr.mxu0 0.0
    %v486 = vand.u32 %v71, 4294901760
    %v487 = vsub.f32 %v71, %v486
    %v488 = vand.u32 %v487, 4294901760
    %489 = vmatpush1.msra.mxu0 %v488
    %490 = vmatprep.subr.mxu0 0.0
    %v491 = vand.u32 %v70, 4294901760
    %v492 = vsub.f32 %v70, %v491
    %v493 = vand.u32 %v492, 4294901760
    %494 = vmatpush1.msra.mxu0 %v493
    %495 = vmatprep.subr.mxu0 0.0
    %v496 = vand.u32 %v69, 4294901760
    %v497 = vsub.f32 %v69, %v496
    %v498 = vand.u32 %v497, 4294901760
    %499 = vmatpush1.msra.mxu0 %v498
    %500 = vmatprep.subr.mxu0 0.0
    %501 = vmatpush2.msra.mxu0 0.0
    %502 = vmatprep.subr.mxu0 0.0
    %503 = vmatpush2.msra.mxu0 0.0
    %504 = vmatprep.subr.mxu0 0.0
    %505 = vmatpush2.msra.mxu0 0.0
    %506 = vmatprep.subr.mxu0 0.0
    %507 = vmatpush2.msra.mxu0 0.0
    %508 = vmatprep.subr.mxu0 0.0
    %509 = vmatpush2.msra.mxu0 0.0
    %510 = vmatprep.subr.mxu0 0.0
    %511 = vmatpush2.msra.mxu0 0.0
    %512 = vmatprep.subr.mxu0 0.0
    %513 = vmatpush2.msra.mxu0 0.0
    %514 = vmatprep.subr.mxu0 0.0
    %515 = vmatpush2.msra.mxu0 0.0
    %516 = vmatprep.subr.mxu0 0.0
    %517 = vmatpush2.msra.mxu0 0.0
    %518 = vmatprep.subr.mxu0 0.0
    %519 = vmatpush2.msra.mxu0 0.0
    %520 = vmatprep.subr.mxu0 0.0
    %521 = vmatpush2.msra.mxu0 0.0
    %522 = vmatprep.subr.mxu0 0.0
    %523 = vmatpush2.msra.mxu0 0.0
    %524 = vmatprep.subr.mxu0 0.0
    %525 = vmatpush2.msra.mxu0 0.0
    %526 = vmatprep.subr.mxu0 0.0
    %527 = vmatpush2.msra.mxu0 0.0
    %528 = vmatprep.subr.mxu0 0.0
    %529 = vmatpush2.msra.mxu0 0.0
    %530 = vmatprep.subr.mxu0 0.0
    %531 = vmatpush2.msra.mxu0 0.0
    %532 = vmatprep.mubr.f32.mxu0 0.0
    %v533 = vand.u32 %v79, 4294901760
    %534 = vmatmul.mubr.f32.gmra.mxu0 %v533
    %v535 = vpop.f32.mrf.mxu0
    %v536 = vadd.f32 %v441, %v535
    %v537 = vpop.f32.mrf.mxu0
    %538 = vdwg.mxu0
    %539 = vmatprep.subr.mxu0 0.0
    %540 = vmatpush1.msra.mxu0 0.0
    %541 = vmatprep.subr.mxu0 0.0
    %542 = vmatpush1.msra.mxu0 0.0
    %543 = vmatprep.subr.mxu0 0.0
    %544 = vmatpush1.msra.mxu0 0.0
    %545 = vmatprep.subr.mxu0 0.0
    %546 = vmatpush1.msra.mxu0 0.0
    %547 = vmatprep.subr.mxu0 0.0
    %548 = vmatpush1.msra.mxu0 0.0
    %549 = vmatprep.subr.mxu0 0.0
    %550 = vmatpush1.msra.mxu0 0.0
    %551 = vmatprep.subr.mxu0 0.0
    %552 = vmatpush1.msra.mxu0 0.0
    %553 = vmatprep.subr.mxu0 0.0
    %554 = vmatpush1.msra.mxu0 0.0
    %555 = vmatprep.subr.mxu0 0.0
    %v556 = vand.u32 %v76, 4294901760
    %557 = vmatpush1.msra.mxu0 %v556
    %558 = vmatprep.subr.mxu0 0.0
    %v559 = vand.u32 %v75, 4294901760
    %560 = vmatpush1.msra.mxu0 %v559
    %561 = vmatprep.subr.mxu0 0.0
    %v562 = vand.u32 %v74, 4294901760
    %563 = vmatpush1.msra.mxu0 %v562
    %564 = vmatprep.subr.mxu0 0.0
    %v565 = vand.u32 %v73, 4294901760
    %566 = vmatpush1.msra.mxu0 %v565
    %567 = vmatprep.subr.mxu0 0.0
    %v568 = vand.u32 %v72, 4294901760
    %569 = vmatpush1.msra.mxu0 %v568
    %570 = vmatprep.subr.mxu0 0.0
    %v571 = vand.u32 %v71, 4294901760
    %572 = vmatpush1.msra.mxu0 %v571
    %573 = vmatprep.subr.mxu0 0.0
    %v574 = vand.u32 %v70, 4294901760
    %575 = vmatpush1.msra.mxu0 %v574
    %576 = vmatprep.subr.mxu0 0.0
    %v577 = vand.u32 %v69, 4294901760
    %578 = vmatpush1.msra.mxu0 %v577
    %579 = vmatprep.subr.mxu0 0.0
    %580 = vmatpush2.msra.mxu0 0.0
    %581 = vmatprep.subr.mxu0 0.0
    %582 = vmatpush2.msra.mxu0 0.0
    %583 = vmatprep.subr.mxu0 0.0
    %584 = vmatpush2.msra.mxu0 0.0
    %585 = vmatprep.subr.mxu0 0.0
    %586 = vmatpush2.msra.mxu0 0.0
    %587 = vmatprep.subr.mxu0 0.0
    %588 = vmatpush2.msra.mxu0 0.0
    %589 = vmatprep.subr.mxu0 0.0
    %590 = vmatpush2.msra.mxu0 0.0
    %591 = vmatprep.subr.mxu0 0.0
    %592 = vmatpush2.msra.mxu0 0.0
    %593 = vmatprep.subr.mxu0 0.0
    %594 = vmatpush2.msra.mxu0 0.0
    %595 = vmatprep.subr.mxu0 0.0
    %596 = vmatpush2.msra.mxu0 0.0
    %597 = vmatprep.subr.mxu0 0.0
    %598 = vmatpush2.msra.mxu0 0.0
    %599 = vmatprep.subr.mxu0 0.0
    %600 = vmatpush2.msra.mxu0 0.0
    %601 = vmatprep.subr.mxu0 0.0
    %602 = vmatpush2.msra.mxu0 0.0
    %603 = vmatprep.subr.mxu0 0.0
    %604 = vmatpush2.msra.mxu0 0.0
    %605 = vmatprep.subr.mxu0 0.0
    %606 = vmatpush2.msra.mxu0 0.0
    %607 = vmatprep.subr.mxu0 0.0
    %608 = vmatpush2.msra.mxu0 0.0
    %609 = vmatprep.subr.mxu0 0.0
    %610 = vmatpush2.msra.mxu0 0.0
    %611 = vmatprep.mubr.f32.mxu0 0.0
    %v612 = vand.u32 %v79, 4294901760
    %613 = vmatmul.mubr.f32.gmra.mxu0 %v612
    %v614 = vpop.f32.mrf.mxu0
    %v615 = vadd.f32 %v536, %v614
    %v616 = vpop.f32.mrf.mxu0
    %617 = vdwg.mxu0
    %v619 = vsel %vm77, %v59, 0
    %621 = vmatprep.subr.mxu0 0.0
    %622 = vmatpush1.msra.mxu0 0.0
    %623 = vmatprep.subr.mxu0 0.0
    %624 = vmatpush1.msra.mxu0 0.0
    %625 = vmatprep.subr.mxu0 0.0
    %626 = vmatpush1.msra.mxu0 0.0
    %627 = vmatprep.subr.mxu0 0.0
    %628 = vmatpush1.msra.mxu0 0.0
    %629 = vmatprep.subr.mxu0 0.0
    %630 = vmatpush1.msra.mxu0 0.0
    %631 = vmatprep.subr.mxu0 0.0
    %632 = vmatpush1.msra.mxu0 0.0
    %633 = vmatprep.subr.mxu0 0.0
    %634 = vmatpush1.msra.mxu0 0.0
    %635 = vmatprep.subr.mxu0 0.0
    %636 = vmatpush1.msra.mxu0 0.0
    %637 = vmatprep.subr.mxu0 0.0
    %v638 = vand.u32 %v67, 4294901760
    %639 = vmatpush1.msra.mxu0 %v638
    %640 = vmatprep.subr.mxu0 0.0
    %v641 = vand.u32 %v66, 4294901760
    %642 = vmatpush1.msra.mxu0 %v641
    %643 = vmatprep.subr.mxu0 0.0
    %v644 = vand.u32 %v65, 4294901760
    %645 = vmatpush1.msra.mxu0 %v644
    %646 = vmatprep.subr.mxu0 0.0
    %v647 = vand.u32 %v64, 4294901760
    %648 = vmatpush1.msra.mxu0 %v647
    %649 = vmatprep.subr.mxu0 0.0
    %v650 = vand.u32 %v63, 4294901760
    %651 = vmatpush1.msra.mxu0 %v650
    %652 = vmatprep.subr.mxu0 0.0
    %v653 = vand.u32 %v62, 4294901760
    %654 = vmatpush1.msra.mxu0 %v653
    %655 = vmatprep.subr.mxu0 0.0
    %v656 = vand.u32 %v61, 4294901760
    %657 = vmatpush1.msra.mxu0 %v656
    %658 = vmatprep.subr.mxu0 0.0
    %v659 = vand.u32 %v60, 4294901760
    %660 = vmatpush1.msra.mxu0 %v659
    %661 = vmatprep.subr.mxu0 0.0
    %662 = vmatpush2.msra.mxu0 0.0
    %663 = vmatprep.subr.mxu0 0.0
    %664 = vmatpush2.msra.mxu0 0.0
    %665 = vmatprep.subr.mxu0 0.0
    %666 = vmatpush2.msra.mxu0 0.0
    %667 = vmatprep.subr.mxu0 0.0
    %668 = vmatpush2.msra.mxu0 0.0
    %669 = vmatprep.subr.mxu0 0.0
    %670 = vmatpush2.msra.mxu0 0.0
    %671 = vmatprep.subr.mxu0 0.0
    %672 = vmatpush2.msra.mxu0 0.0
    %673 = vmatprep.subr.mxu0 0.0
    %674 = vmatpush2.msra.mxu0 0.0
    %675 = vmatprep.subr.mxu0 0.0
    %676 = vmatpush2.msra.mxu0 0.0
    %677 = vmatprep.subr.mxu0 0.0
    %678 = vmatpush2.msra.mxu0 0.0
    %679 = vmatprep.subr.mxu0 0.0
    %680 = vmatpush2.msra.mxu0 0.0
    %681 = vmatprep.subr.mxu0 0.0
    %682 = vmatpush2.msra.mxu0 0.0
    %683 = vmatprep.subr.mxu0 0.0
    %684 = vmatpush2.msra.mxu0 0.0
    %685 = vmatprep.subr.mxu0 0.0
    %686 = vmatpush2.msra.mxu0 0.0
    %687 = vmatprep.subr.mxu0 0.0
    %688 = vmatpush2.msra.mxu0 0.0
    %689 = vmatprep.subr.mxu0 0.0
    %690 = vmatpush2.msra.mxu0 0.0
    %691 = vmatprep.subr.mxu0 0.0
    %692 = vmatpush2.msra.mxu0 0.0
    %693 = vmatprep.mubr.f32.mxu0 0.0
    %v694 = vand.u32 %v619, 4294901760
    %v695 = vsub.f32 %v619, %v694
    %v696 = vand.u32 %v695, 4294901760
    %v697 = vsub.f32 %v695, %v696
    %v698 = vand.u32 %v697, 4294901760
    %699 = vmatmul.mubr.f32.gmra.mxu0 %v698
    %v700 = vpop.f32.mrf.mxu0
    %v701 = vadd.f32 %v615, %v700
    %v702 = vpop.f32.mrf.mxu0
    %703 = vdwg.mxu0
    %704 = vmatprep.subr.mxu0 0.0
    %705 = vmatpush1.msra.mxu0 0.0
    %706 = vmatprep.subr.mxu0 0.0
    %707 = vmatpush1.msra.mxu0 0.0
    %708 = vmatprep.subr.mxu0 0.0
    %709 = vmatpush1.msra.mxu0 0.0
    %710 = vmatprep.subr.mxu0 0.0
    %711 = vmatpush1.msra.mxu0 0.0
    %712 = vmatprep.subr.mxu0 0.0
    %713 = vmatpush1.msra.mxu0 0.0
    %714 = vmatprep.subr.mxu0 0.0
    %715 = vmatpush1.msra.mxu0 0.0
    %716 = vmatprep.subr.mxu0 0.0
    %717 = vmatpush1.msra.mxu0 0.0
    %718 = vmatprep.subr.mxu0 0.0
    %719 = vmatpush1.msra.mxu0 0.0
    %720 = vmatprep.subr.mxu0 0.0
    %v721 = vand.u32 %v67, 4294901760
    %v722 = vsub.f32 %v67, %v721
    %v723 = vand.u32 %v722, 4294901760
    %v724 = vsub.f32 %v722, %v723
    %v725 = vand.u32 %v724, 4294901760
    %726 = vmatpush1.msra.mxu0 %v725
    %727 = vmatprep.subr.mxu0 0.0
    %v728 = vand.u32 %v66, 4294901760
    %v729 = vsub.f32 %v66, %v728
    %v730 = vand.u32 %v729, 4294901760
    %v731 = vsub.f32 %v729, %v730
    %v732 = vand.u32 %v731, 4294901760
    %733 = vmatpush1.msra.mxu0 %v732
    %734 = vmatprep.subr.mxu0 0.0
    %v735 = vand.u32 %v65, 4294901760
    %v736 = vsub.f32 %v65, %v735
    %v737 = vand.u32 %v736, 4294901760
    %v738 = vsub.f32 %v736, %v737
    %v739 = vand.u32 %v738, 4294901760
    %740 = vmatpush1.msra.mxu0 %v739
    %741 = vmatprep.subr.mxu0 0.0
    %v742 = vand.u32 %v64, 4294901760
    %v743 = vsub.f32 %v64, %v742
    %v744 = vand.u32 %v743, 4294901760
    %v745 = vsub.f32 %v743, %v744
    %v746 = vand.u32 %v745, 4294901760
    %747 = vmatpush1.msra.mxu0 %v746
    %748 = vmatprep.subr.mxu0 0.0
    %v749 = vand.u32 %v63, 4294901760
    %v750 = vsub.f32 %v63, %v749
    %v751 = vand.u32 %v750, 4294901760
    %v752 = vsub.f32 %v750, %v751
    %v753 = vand.u32 %v752, 4294901760
    %754 = vmatpush1.msra.mxu0 %v753
    %755 = vmatprep.subr.mxu0 0.0
    %v756 = vand.u32 %v62, 4294901760
    %v757 = vsub.f32 %v62, %v756
    %v758 = vand.u32 %v757, 4294901760
    %v759 = vsub.f32 %v757, %v758
    %v760 = vand.u32 %v759, 4294901760
    %761 = vmatpush1.msra.mxu0 %v760
    %762 = vmatprep.subr.mxu0 0.0
    %v763 = vand.u32 %v61, 4294901760
    %v764 = vsub.f32 %v61, %v763
    %v765 = vand.u32 %v764, 4294901760
    %v766 = vsub.f32 %v764, %v765
    %v767 = vand.u32 %v766, 4294901760
    %768 = vmatpush1.msra.mxu0 %v767
    %769 = vmatprep.subr.mxu0 0.0
    %v770 = vand.u32 %v60, 4294901760
    %v771 = vsub.f32 %v60, %v770
    %v772 = vand.u32 %v771, 4294901760
    %v773 = vsub.f32 %v771, %v772
    %v774 = vand.u32 %v773, 4294901760
    %775 = vmatpush1.msra.mxu0 %v774
    %776 = vmatprep.subr.mxu0 0.0
    %777 = vmatpush2.msra.mxu0 0.0
    %778 = vmatprep.subr.mxu0 0.0
    %779 = vmatpush2.msra.mxu0 0.0
    %780 = vmatprep.subr.mxu0 0.0
    %781 = vmatpush2.msra.mxu0 0.0
    %782 = vmatprep.subr.mxu0 0.0
    %783 = vmatpush2.msra.mxu0 0.0
    %784 = vmatprep.subr.mxu0 0.0
    %785 = vmatpush2.msra.mxu0 0.0
    %786 = vmatprep.subr.mxu0 0.0
    %787 = vmatpush2.msra.mxu0 0.0
    %788 = vmatprep.subr.mxu0 0.0
    %789 = vmatpush2.msra.mxu0 0.0
    %790 = vmatprep.subr.mxu0 0.0
    %791 = vmatpush2.msra.mxu0 0.0
    %792 = vmatprep.subr.mxu0 0.0
    %793 = vmatpush2.msra.mxu0 0.0
    %794 = vmatprep.subr.mxu0 0.0
    %795 = vmatpush2.msra.mxu0 0.0
    %796 = vmatprep.subr.mxu0 0.0
    %797 = vmatpush2.msra.mxu0 0.0
    %798 = vmatprep.subr.mxu0 0.0
    %799 = vmatpush2.msra.mxu0 0.0
    %800 = vmatprep.subr.mxu0 0.0
    %801 = vmatpush2.msra.mxu0 0.0
    %802 = vmatprep.subr.mxu0 0.0
    %803 = vmatpush2.msra.mxu0 0.0
    %804 = vmatprep.subr.mxu0 0.0
    %805 = vmatpush2.msra.mxu0 0.0
    %806 = vmatprep.subr.mxu0 0.0
    %807 = vmatpush2.msra.mxu0 0.0
    %808 = vmatprep.mubr.f32.mxu0 0.0
    %v809 = vand.u32 %v619, 4294901760
    %810 = vmatmul.mubr.f32.gmra.mxu0 %v809
    %v811 = vpop.f32.mrf.mxu0
    %v812 = vadd.f32 %v701, %v811
    %v813 = vpop.f32.mrf.mxu0
    %814 = vdwg.mxu0
    %815 = vmatprep.subr.mxu0 0.0
    %816 = vmatpush1.msra.mxu0 0.0
    %817 = vmatprep.subr.mxu0 0.0
    %818 = vmatpush1.msra.mxu0 0.0
    %819 = vmatprep.subr.mxu0 0.0
    %820 = vmatpush1.msra.mxu0 0.0
    %821 = vmatprep.subr.mxu0 0.0
    %822 = vmatpush1.msra.mxu0 0.0
    %823 = vmatprep.subr.mxu0 0.0
    %824 = vmatpush1.msra.mxu0 0.0
    %825 = vmatprep.subr.mxu0 0.0
    %826 = vmatpush1.msra.mxu0 0.0
    %827 = vmatprep.subr.mxu0 0.0
    %828 = vmatpush1.msra.mxu0 0.0
    %829 = vmatprep.subr.mxu0 0.0
    %830 = vmatpush1.msra.mxu0 0.0
    %831 = vmatprep.subr.mxu0 0.0
    %v832 = vand.u32 %v67, 4294901760
    %v833 = vsub.f32 %v67, %v832
    %834 = vmatpush1.msra.mxu0 %v833
    %835 = vmatprep.subr.mxu0 0.0
    %v836 = vand.u32 %v66, 4294901760
    %v837 = vsub.f32 %v66, %v836
    %838 = vmatpush1.msra.mxu0 %v837
    %839 = vmatprep.subr.mxu0 0.0
    %v840 = vand.u32 %v65, 4294901760
    %v841 = vsub.f32 %v65, %v840
    %842 = vmatpush1.msra.mxu0 %v841
    %843 = vmatprep.subr.mxu0 0.0
    %v844 = vand.u32 %v64, 4294901760
    %v845 = vsub.f32 %v64, %v844
    %846 = vmatpush1.msra.mxu0 %v845
    %847 = vmatprep.subr.mxu0 0.0
    %v848 = vand.u32 %v63, 4294901760
    %v849 = vsub.f32 %v63, %v848
    %850 = vmatpush1.msra.mxu0 %v849
    %851 = vmatprep.subr.mxu0 0.0
    %v852 = vand.u32 %v62, 4294901760
    %v853 = vsub.f32 %v62, %v852
    %854 = vmatpush1.msra.mxu0 %v853
    %855 = vmatprep.subr.mxu0 0.0
    %v856 = vand.u32 %v61, 4294901760
    %v857 = vsub.f32 %v61, %v856
    %858 = vmatpush1.msra.mxu0 %v857
    %859 = vmatprep.subr.mxu0 0.0
    %v860 = vand.u32 %v60, 4294901760
    %v861 = vsub.f32 %v60, %v860
    %862 = vmatpush1.msra.mxu0 %v861
    %863 = vmatprep.subr.mxu0 0.0
    %864 = vmatpush2.msra.mxu0 0.0
    %865 = vmatprep.subr.mxu0 0.0
    %866 = vmatpush2.msra.mxu0 0.0
    %867 = vmatprep.subr.mxu0 0.0
    %868 = vmatpush2.msra.mxu0 0.0
    %869 = vmatprep.subr.mxu0 0.0
    %870 = vmatpush2.msra.mxu0 0.0
    %871 = vmatprep.subr.mxu0 0.0
    %872 = vmatpush2.msra.mxu0 0.0
    %873 = vmatprep.subr.mxu0 0.0
    %874 = vmatpush2.msra.mxu0 0.0
    %875 = vmatprep.subr.mxu0 0.0
    %876 = vmatpush2.msra.mxu0 0.0
    %877 = vmatprep.subr.mxu0 0.0
    %878 = vmatpush2.msra.mxu0 0.0
    %879 = vmatprep.subr.mxu0 0.0
    %880 = vmatpush2.msra.mxu0 0.0
    %881 = vmatprep.subr.mxu0 0.0
    %882 = vmatpush2.msra.mxu0 0.0
    %883 = vmatprep.subr.mxu0 0.0
    %884 = vmatpush2.msra.mxu0 0.0
    %885 = vmatprep.subr.mxu0 0.0
    %886 = vmatpush2.msra.mxu0 0.0
    %887 = vmatprep.subr.mxu0 0.0
    %888 = vmatpush2.msra.mxu0 0.0
    %889 = vmatprep.subr.mxu0 0.0
    %890 = vmatpush2.msra.mxu0 0.0
    %891 = vmatprep.subr.mxu0 0.0
    %892 = vmatpush2.msra.mxu0 0.0
    %893 = vmatprep.subr.mxu0 0.0
    %894 = vmatpush2.msra.mxu0 0.0
    %895 = vmatprep.mubr.f32.mxu0 0.0
    %v896 = vand.u32 %v619, 4294901760
    %v897 = vsub.f32 %v619, %v896
    %898 = vmatmul.mubr.f32.gmra.mxu0 %v897
    %v899 = vpop.f32.mrf.mxu0
    %v900 = vadd.f32 %v812, %v899
    %v901 = vpop.f32.mrf.mxu0
    %902 = vdwg.mxu0
    %903 = vmatprep.subr.mxu0 0.0
    %904 = vmatpush1.msra.mxu0 0.0
    %905 = vmatprep.subr.mxu0 0.0
    %906 = vmatpush1.msra.mxu0 0.0
    %907 = vmatprep.subr.mxu0 0.0
    %908 = vmatpush1.msra.mxu0 0.0
    %909 = vmatprep.subr.mxu0 0.0
    %910 = vmatpush1.msra.mxu0 0.0
    %911 = vmatprep.subr.mxu0 0.0
    %912 = vmatpush1.msra.mxu0 0.0
    %913 = vmatprep.subr.mxu0 0.0
    %914 = vmatpush1.msra.mxu0 0.0
    %915 = vmatprep.subr.mxu0 0.0
    %916 = vmatpush1.msra.mxu0 0.0
    %917 = vmatprep.subr.mxu0 0.0
    %918 = vmatpush1.msra.mxu0 0.0
    %919 = vmatprep.subr.mxu0 0.0
    %v920 = vand.u32 %v67, 4294901760
    %921 = vmatpush1.msra.mxu0 %v920
    %922 = vmatprep.subr.mxu0 0.0
    %v923 = vand.u32 %v66, 4294901760
    %924 = vmatpush1.msra.mxu0 %v923
    %925 = vmatprep.subr.mxu0 0.0
    %v926 = vand.u32 %v65, 4294901760
    %927 = vmatpush1.msra.mxu0 %v926
    %928 = vmatprep.subr.mxu0 0.0
    %v929 = vand.u32 %v64, 4294901760
    %930 = vmatpush1.msra.mxu0 %v929
    %931 = vmatprep.subr.mxu0 0.0
    %v932 = vand.u32 %v63, 4294901760
    %933 = vmatpush1.msra.mxu0 %v932
    %934 = vmatprep.subr.mxu0 0.0
    %v935 = vand.u32 %v62, 4294901760
    %936 = vmatpush1.msra.mxu0 %v935
    %937 = vmatprep.subr.mxu0 0.0
    %v938 = vand.u32 %v61, 4294901760
    %939 = vmatpush1.msra.mxu0 %v938
    %940 = vmatprep.subr.mxu0 0.0
    %v941 = vand.u32 %v60, 4294901760
    %942 = vmatpush1.msra.mxu0 %v941
    %943 = vmatprep.subr.mxu0 0.0
    %944 = vmatpush2.msra.mxu0 0.0
    %945 = vmatprep.subr.mxu0 0.0
    %946 = vmatpush2.msra.mxu0 0.0
    %947 = vmatprep.subr.mxu0 0.0
    %948 = vmatpush2.msra.mxu0 0.0
    %949 = vmatprep.subr.mxu0 0.0
    %950 = vmatpush2.msra.mxu0 0.0
    %951 = vmatprep.subr.mxu0 0.0
    %952 = vmatpush2.msra.mxu0 0.0
    %953 = vmatprep.subr.mxu0 0.0
    %954 = vmatpush2.msra.mxu0 0.0
    %955 = vmatprep.subr.mxu0 0.0
    %956 = vmatpush2.msra.mxu0 0.0
    %957 = vmatprep.subr.mxu0 0.0
    %958 = vmatpush2.msra.mxu0 0.0
    %959 = vmatprep.subr.mxu0 0.0
    %960 = vmatpush2.msra.mxu0 0.0
    %961 = vmatprep.subr.mxu0 0.0
    %962 = vmatpush2.msra.mxu0 0.0
    %963 = vmatprep.subr.mxu0 0.0
    %964 = vmatpush2.msra.mxu0 0.0
    %965 = vmatprep.subr.mxu0 0.0
    %966 = vmatpush2.msra.mxu0 0.0
    %967 = vmatprep.subr.mxu0 0.0
    %968 = vmatpush2.msra.mxu0 0.0
    %969 = vmatprep.subr.mxu0 0.0
    %970 = vmatpush2.msra.mxu0 0.0
    %971 = vmatprep.subr.mxu0 0.0
    %972 = vmatpush2.msra.mxu0 0.0
    %973 = vmatprep.subr.mxu0 0.0
    %974 = vmatpush2.msra.mxu0 0.0
    %975 = vmatprep.mubr.f32.mxu0 0.0
    %v976 = vand.u32 %v619, 4294901760
    %v977 = vsub.f32 %v619, %v976
    %v978 = vand.u32 %v977, 4294901760
    %979 = vmatmul.mubr.f32.gmra.mxu0 %v978
    %v980 = vpop.f32.mrf.mxu0
    %v981 = vadd.f32 %v900, %v980
    %v982 = vpop.f32.mrf.mxu0
    %983 = vdwg.mxu0
    %984 = vmatprep.subr.mxu0 0.0
    %985 = vmatpush1.msra.mxu0 0.0
    %986 = vmatprep.subr.mxu0 0.0
    %987 = vmatpush1.msra.mxu0 0.0
    %988 = vmatprep.subr.mxu0 0.0
    %989 = vmatpush1.msra.mxu0 0.0
    %990 = vmatprep.subr.mxu0 0.0
    %991 = vmatpush1.msra.mxu0 0.0
    %992 = vmatprep.subr.mxu0 0.0
    %993 = vmatpush1.msra.mxu0 0.0
    %994 = vmatprep.subr.mxu0 0.0
    %995 = vmatpush1.msra.mxu0 0.0
    %996 = vmatprep.subr.mxu0 0.0
    %997 = vmatpush1.msra.mxu0 0.0
    %998 = vmatprep.subr.mxu0 0.0
    %999 = vmatpush1.msra.mxu0 0.0
    %1000 = vmatprep.subr.mxu0 0.0
    %v1001 = vand.u32 %v67, 4294901760
    %v1002 = vsub.f32 %v67, %v1001
    %v1003 = vand.u32 %v1002, 4294901760
    %1004 = vmatpush1.msra.mxu0 %v1003
    %1005 = vmatprep.subr.mxu0 0.0
    %v1006 = vand.u32 %v66, 4294901760
    %v1007 = vsub.f32 %v66, %v1006
    %v1008 = vand.u32 %v1007, 4294901760
    %1009 = vmatpush1.msra.mxu0 %v1008
    %1010 = vmatprep.subr.mxu0 0.0
    %v1011 = vand.u32 %v65, 4294901760
    %v1012 = vsub.f32 %v65, %v1011
    %v1013 = vand.u32 %v1012, 4294901760
    %1014 = vmatpush1.msra.mxu0 %v1013
    %1015 = vmatprep.subr.mxu0 0.0
    %v1016 = vand.u32 %v64, 4294901760
    %v1017 = vsub.f32 %v64, %v1016
    %v1018 = vand.u32 %v1017, 4294901760
    %1019 = vmatpush1.msra.mxu0 %v1018
    %1020 = vmatprep.subr.mxu0 0.0
    %v1021 = vand.u32 %v63, 4294901760
    %v1022 = vsub.f32 %v63, %v1021
    %v1023 = vand.u32 %v1022, 4294901760
    %1024 = vmatpush1.msra.mxu0 %v1023
    %1025 = vmatprep.subr.mxu0 0.0
    %v1026 = vand.u32 %v62, 4294901760
    %v1027 = vsub.f32 %v62, %v1026
    %v1028 = vand.u32 %v1027, 4294901760
    %1029 = vmatpush1.msra.mxu0 %v1028
    %1030 = vmatprep.subr.mxu0 0.0
    %v1031 = vand.u32 %v61, 4294901760
    %v1032 = vsub.f32 %v61, %v1031
    %v1033 = vand.u32 %v1032, 4294901760
    %1034 = vmatpush1.msra.mxu0 %v1033
    %1035 = vmatprep.subr.mxu0 0.0
    %v1036 = vand.u32 %v60, 4294901760
    %v1037 = vsub.f32 %v60, %v1036
    %v1038 = vand.u32 %v1037, 4294901760
    %1039 = vmatpush1.msra.mxu0 %v1038
    %1040 = vmatprep.subr.mxu0 0.0
    %1041 = vmatpush2.msra.mxu0 0.0
    %1042 = vmatprep.subr.mxu0 0.0
    %1043 = vmatpush2.msra.mxu0 0.0
    %1044 = vmatprep.subr.mxu0 0.0
    %1045 = vmatpush2.msra.mxu0 0.0
    %1046 = vmatprep.subr.mxu0 0.0
    %1047 = vmatpush2.msra.mxu0 0.0
    %1048 = vmatprep.subr.mxu0 0.0
    %1049 = vmatpush2.msra.mxu0 0.0
    %1050 = vmatprep.subr.mxu0 0.0
    %1051 = vmatpush2.msra.mxu0 0.0
    %1052 = vmatprep.subr.mxu0 0.0
    %1053 = vmatpush2.msra.mxu0 0.0
    %1054 = vmatprep.subr.mxu0 0.0
    %1055 = vmatpush2.msra.mxu0 0.0
    %1056 = vmatprep.subr.mxu0 0.0
    %1057 = vmatpush2.msra.mxu0 0.0
    %1058 = vmatprep.subr.mxu0 0.0
    %1059 = vmatpush2.msra.mxu0 0.0
    %1060 = vmatprep.subr.mxu0 0.0
    %1061 = vmatpush2.msra.mxu0 0.0
    %1062 = vmatprep.subr.mxu0 0.0
    %1063 = vmatpush2.msra.mxu0 0.0
    %1064 = vmatprep.subr.mxu0 0.0
    %1065 = vmatpush2.msra.mxu0 0.0
    %1066 = vmatprep.subr.mxu0 0.0
    %1067 = vmatpush2.msra.mxu0 0.0
    %1068 = vmatprep.subr.mxu0 0.0
    %1069 = vmatpush2.msra.mxu0 0.0
    %1070 = vmatprep.subr.mxu0 0.0
    %1071 = vmatpush2.msra.mxu0 0.0
    %1072 = vmatprep.mubr.f32.mxu0 0.0
    %v1073 = vand.u32 %v619, 4294901760
    %1074 = vmatmul.mubr.f32.gmra.mxu0 %v1073
    %v1075 = vpop.f32.mrf.mxu0
    %v1076 = vadd.f32 %v981, %v1075
    %v1077 = vpop.f32.mrf.mxu0
    %1078 = vdwg.mxu0
    %1079 = vmatprep.subr.mxu0 0.0
    %1080 = vmatpush1.msra.mxu0 0.0
    %1081 = vmatprep.subr.mxu0 0.0
    %1082 = vmatpush1.msra.mxu0 0.0
    %1083 = vmatprep.subr.mxu0 0.0
    %1084 = vmatpush1.msra.mxu0 0.0
    %1085 = vmatprep.subr.mxu0 0.0
    %1086 = vmatpush1.msra.mxu0 0.0
    %1087 = vmatprep.subr.mxu0 0.0
    %1088 = vmatpush1.msra.mxu0 0.0
    %1089 = vmatprep.subr.mxu0 0.0
    %1090 = vmatpush1.msra.mxu0 0.0
    %1091 = vmatprep.subr.mxu0 0.0
    %1092 = vmatpush1.msra.mxu0 0.0
    %1093 = vmatprep.subr.mxu0 0.0
    %1094 = vmatpush1.msra.mxu0 0.0
    %1095 = vmatprep.subr.mxu0 0.0
    %v1096 = vand.u32 %v67, 4294901760
    %1097 = vmatpush1.msra.mxu0 %v1096
    %1098 = vmatprep.subr.mxu0 0.0
    %v1099 = vand.u32 %v66, 4294901760
    %1100 = vmatpush1.msra.mxu0 %v1099
    %1101 = vmatprep.subr.mxu0 0.0
    %v1102 = vand.u32 %v65, 4294901760
    %1103 = vmatpush1.msra.mxu0 %v1102
    %1104 = vmatprep.subr.mxu0 0.0
    %v1105 = vand.u32 %v64, 4294901760
    %1106 = vmatpush1.msra.mxu0 %v1105
    %1107 = vmatprep.subr.mxu0 0.0
    %v1108 = vand.u32 %v63, 4294901760
    %1109 = vmatpush1.msra.mxu0 %v1108
    %1110 = vmatprep.subr.mxu0 0.0
    %v1111 = vand.u32 %v62, 4294901760
    %1112 = vmatpush1.msra.mxu0 %v1111
    %1113 = vmatprep.subr.mxu0 0.0
    %v1114 = vand.u32 %v61, 4294901760
    %1115 = vmatpush1.msra.mxu0 %v1114
    %1116 = vmatprep.subr.mxu0 0.0
    %v1117 = vand.u32 %v60, 4294901760
    %1118 = vmatpush1.msra.mxu0 %v1117
    %1119 = vmatprep.subr.mxu0 0.0
    %1120 = vmatpush2.msra.mxu0 0.0
    %1121 = vmatprep.subr.mxu0 0.0
    %1122 = vmatpush2.msra.mxu0 0.0
    %1123 = vmatprep.subr.mxu0 0.0
    %1124 = vmatpush2.msra.mxu0 0.0
    %1125 = vmatprep.subr.mxu0 0.0
    %1126 = vmatpush2.msra.mxu0 0.0
    %1127 = vmatprep.subr.mxu0 0.0
    %1128 = vmatpush2.msra.mxu0 0.0
    %1129 = vmatprep.subr.mxu0 0.0
    %1130 = vmatpush2.msra.mxu0 0.0
    %1131 = vmatprep.subr.mxu0 0.0
    %1132 = vmatpush2.msra.mxu0 0.0
    %1133 = vmatprep.subr.mxu0 0.0
    %1134 = vmatpush2.msra.mxu0 0.0
    %1135 = vmatprep.subr.mxu0 0.0
    %1136 = vmatpush2.msra.mxu0 0.0
    %1137 = vmatprep.subr.mxu0 0.0
    %1138 = vmatpush2.msra.mxu0 0.0
    %1139 = vmatprep.subr.mxu0 0.0
    %1140 = vmatpush2.msra.mxu0 0.0
    %1141 = vmatprep.subr.mxu0 0.0
    %1142 = vmatpush2.msra.mxu0 0.0
    %1143 = vmatprep.subr.mxu0 0.0
    %1144 = vmatpush2.msra.mxu0 0.0
    %1145 = vmatprep.subr.mxu0 0.0
    %1146 = vmatpush2.msra.mxu0 0.0
    %1147 = vmatprep.subr.mxu0 0.0
    %1148 = vmatpush2.msra.mxu0 0.0
    %1149 = vmatprep.subr.mxu0 0.0
    %1150 = vmatpush2.msra.mxu0 0.0
    %1151 = vmatprep.mubr.f32.mxu0 0.0
    %v1152 = vand.u32 %v619, 4294901760
    %1153 = vmatmul.mubr.f32.gmra.mxu0 %v1152
    %v1154 = vpop.f32.mrf.mxu0
    %v1155 = vadd.f32 %v1076, %v1154
    %v1156 = vpop.f32.mrf.mxu0
    %1157 = vdwg.mxu0
    %1158 = vst [vmem:[#allocation8] sm:$0xff] %v1155
    // Predicated region
    $region30: #{tpu_custom_call.1} parent=1 // pred_check
      _
    $region31: #{tpu_custom_call.1} parent=1 // pred_check_branch
      %1160 = sbr.rel (0) target = $region33
    $region32: #{tpu_custom_call.1} parent=1 // pred_region
      %s1162 = ssub.s32 128, 16
      %1163 = vsyncadd [#allocation4], %s1162
      %s1164 = sshll.u32 [#allocation8], 4
      %s1165 = int_to_ptr.vmem [resolvable:$true] %s1164
      %1170 = dma.vmem_to_hbm [thread:$0]  %s1165, 16, %s4, [#allocation4], 16, 16, 1
    $region33: #{tpu_custom_call.1} parent=1 // pred_fallthru
      _
    // Predicated region
    $region34: #{tpu_custom_call.1} parent=1 // pred_check
      _
    $region35: #{tpu_custom_call.1} parent=1 // pred_check_branch
      %1172 = sbr.rel (0) target = $region37
    $region36: #{tpu_custom_call.1} parent=1 // pred_region
      %1173 = dma.done [#allocation4], 128
    $region37: #{tpu_custom_call.1} parent=1 // pred_fallthru
      _
    %1174 = vsyncpa [#allocation3], 1
    %1175 = vsyncpa [#allocation6], 1
    %1176 = vsyncpa [#allocation4], 1

</llo_original>
